<compile_context>
chip_gen: v5e
topology: v5e:2x2
jax: 0.10.0
libtpu: 0.0.40
codegen_flags: <defaults>
</compile_context>

<pallas_src>
import jax
import jax.numpy as jnp
from jax.experimental import pallas as pl
from jax.experimental.pallas import tpu as pltpu  # noqa: F401  (imported per convention)

# ---------------- model dimensions ----------------
B, T, D = 2, 8, 16          # batch, seq len, lstm input_size
H = 32                      # lstm hidden_size (num_layers=1, unidirectional)
E = 32                      # emotion_embedding_size
H1, H2 = 32, 16             # classifier hidden_sizes
C = 4                       # classes_num


# ---------------- fused Pallas kernel ----------------
def emotion_classifier_kernel(x_ref, wih_ref, whh_ref, b_ref,
                              wemb_ref, bemb_ref, w1_ref, b1_ref,
                              w2_ref, b2_ref, wc_ref, bc_ref, out_ref):
    """LSTM recurrence (final h_n) + EmotionEmbedding tail + classifier MLP, fused."""
    # x_ref is time-major flattened: row t*B + b holds (timestep t, batch b).
    # Hoisted input projection + bias for ALL timesteps: one MXU matmul, bias added once.
    pre = jnp.dot(x_ref[...], wih_ref[...],
                  preferred_element_type=jnp.float32) + b_ref[...]        # (T*B, 4H)
    whh = whh_ref[...]                                                    # (H, 4H)

    # h / c live in vregs across the (small, static, unrolled) recurrence.
    h = jnp.zeros((B, H), jnp.float32)
    c = jnp.zeros((B, H), jnp.float32)
    for t in range(T):
        gates = pre[t * B:(t + 1) * B, :] + jnp.dot(
            h, whh, preferred_element_type=jnp.float32)                   # (B, 4H); i,f,g,o
        sg = jax.nn.sigmoid(gates)     # full-vreg EUP pass (i, f, o lanes used)
        tg = jnp.tanh(gates)           # full-vreg EUP pass (g lanes used)
        i = sg[:, 0:H]
        f = sg[:, H:2 * H]
        o = sg[:, 3 * H:4 * H]
        g = tg[:, 2 * H:3 * H]
        c = f * c + i * g
        h = o * jnp.tanh(c)

    # EmotionEmbedding tail: sum(h_n, dim=0) over 1 layer == h_n; relu; dropout(identity);
    # emotion_embedding linear.
    z = jnp.maximum(h, 0.0)
    emb = jnp.dot(z, wemb_ref[...], preferred_element_type=jnp.float32) + bemb_ref[...]
    # EmotionClassifier head: relu; dropout(id); hidden linears + relu + dropout(id); classifier.
    z = jnp.maximum(emb, 0.0)
    z = jnp.maximum(jnp.dot(z, w1_ref[...], preferred_element_type=jnp.float32) + b1_ref[...], 0.0)
    z = jnp.maximum(jnp.dot(z, w2_ref[...], preferred_element_type=jnp.float32) + b2_ref[...], 0.0)
    out_ref[...] = jnp.dot(z, wc_ref[...], preferred_element_type=jnp.float32) + bc_ref[...]


# ---------------- wrapper ----------------
def emotion_classifier_forward(x, lstm_params, head_params):
    wih_t, whh_t, b = lstm_params
    wemb, bemb, w1, b1, w2, b2, wc, bc = head_params
    # Layout plumbing outside the kernel: (B, T, D) -> time-major (T*B, D) so the hoisted
    # input projection is a single contiguous matmul and per-step slices are sublane rows.
    x_tm = jnp.transpose(x, (1, 0, 2)).reshape(T * B, D)
    # No grid: every operand is a single full-array VMEM block (all << VMEM limits on
    # v5e / v6e / v7x), so no pipelining overhead and no BlockSpec machinery.
    return pl.pallas_call(
        emotion_classifier_kernel,
        out_shape=jax.ShapeDtypeStruct((B, C), jnp.float32),
    )(x_tm, wih_t, whh_t, b, wemb, bemb, w1, b1, w2, b2, wc, bc)


# ---------------- pure-JAX reference (PyTorch semantics) ----------------
def reference_forward(x, lstm_params, head_params):
    wih_t, whh_t, b = lstm_params
    wemb, bemb, w1, b1, w2, b2, wc, bc = head_params
    h = jnp.zeros((B, H), jnp.float32)
    c = jnp.zeros((B, H), jnp.float32)
    for t in range(T):
        gates = x[:, t, :] @ wih_t + h @ whh_t + b
        i = jax.nn.sigmoid(gates[:, 0:H])
        f = jax.nn.sigmoid(gates[:, H:2 * H])
        g = jnp.tanh(gates[:, 2 * H:3 * H])
        o = jax.nn.sigmoid(gates[:, 3 * H:4 * H])
        c = f * c + i * g
        h = o * jnp.tanh(c)
    z = jax.nn.relu(h)
    emb = z @ wemb + bemb
    z = jax.nn.relu(emb)
    z = jax.nn.relu(z @ w1 + b1)
    z = jax.nn.relu(z @ w2 + b2)
    return z @ wc + bc


# ---------------- deterministic params + run ----------------
if __name__ == "__main__":
    key = jax.random.PRNGKey(0)
    ks = jax.random.split(key, 12)

    def uni(k, shape, scale):
        return jax.random.uniform(k, shape, jnp.float32, -scale, scale)

    # LSTM params (PyTorch stores (4H, D)/(4H, H); we keep the transposed (in, 4H) layout,
    # gate column order i, f, g, o).
    s = 1.0 / jnp.sqrt(H)
    wih_t = uni(ks[0], (D, 4 * H), s)
    whh_t = uni(ks[1], (H, 4 * H), s)
    b_lstm = uni(ks[2], (1, 4 * H), s) + uni(ks[3], (1, 4 * H), s)   # b_ih + b_hh pre-summed

    # Linear layers, stored as (in, out) with (1, out) biases.
    wemb = uni(ks[4], (H, E), 1.0 / jnp.sqrt(H));    bemb = uni(ks[5], (1, E), 1.0 / jnp.sqrt(H))
    w1   = uni(ks[6], (E, H1), 1.0 / jnp.sqrt(E));   b1   = uni(ks[7], (1, H1), 1.0 / jnp.sqrt(E))
    w2   = uni(ks[8], (H1, H2), 1.0 / jnp.sqrt(H1)); b2   = uni(ks[9], (1, H2), 1.0 / jnp.sqrt(H1))
    wc   = uni(ks[10], (H2, C), 1.0 / jnp.sqrt(H2)); bc   = uni(ks[11], (1, C), 1.0 / jnp.sqrt(H2))

    lstm_params = (wih_t, whh_t, b_lstm)
    head_params = (wemb, bemb, w1, b1, w2, b2, wc, bc)

    x = jax.random.normal(jax.random.PRNGKey(1), (B, T, D), jnp.float32)

    out = jax.jit(emotion_classifier_forward)(x, lstm_params, head_params)
    out = jax.block_until_ready(out)

    ref = reference_forward(x, lstm_params, head_params)
    assert out.shape == (B, C)
    assert jnp.allclose(out, ref, atol=1e-5, rtol=1e-5), (out, ref)

    # TODO(synk): dropout layers are treated as identity (inference semantics); training-mode
    # stochastic dropout would need pltpu.prng_seed / prng_random_bits masks. PackedSequence /
    # variable-length inputs are not modeled (fixed-length batch-first tensor assumed).
    print("KERNEL_OK")
</pallas_src>

<mosaic_0001>
module attributes {stable_mosaic.version = 11 : i64} {
  func.func @emotion_classifier_kernel(%arg0: memref<16x16xf32, #tpu.memory_space<vmem>>, %arg1: memref<16x128xf32, #tpu.memory_space<vmem>>, %arg2: memref<32x128xf32, #tpu.memory_space<vmem>>, %arg3: memref<1x128xf32, #tpu.memory_space<vmem>>, %arg4: memref<32x32xf32, #tpu.memory_space<vmem>>, %arg5: memref<1x32xf32, #tpu.memory_space<vmem>>, %arg6: memref<32x32xf32, #tpu.memory_space<vmem>>, %arg7: memref<1x32xf32, #tpu.memory_space<vmem>>, %arg8: memref<32x16xf32, #tpu.memory_space<vmem>>, %arg9: memref<1x16xf32, #tpu.memory_space<vmem>>, %arg10: memref<16x4xf32, #tpu.memory_space<vmem>>, %arg11: memref<1x4xf32, #tpu.memory_space<vmem>>, %arg12: memref<2x4xf32, #tpu.memory_space<vmem>>) attributes {dimension_semantics = [], scalar_prefetch = 0 : i64, scratch_operands = 0 : i64, tpu.core_type = #tpu.core_type<tc>} {
    %c0 = arith.constant 0 : index
    %c0_0 = arith.constant 0 : index
    %0 = vector.load %arg0[%c0, %c0_0] : memref<16x16xf32, #tpu.memory_space<vmem>>, vector<16x16xf32>
    %c0_1 = arith.constant 0 : index
    %c0_2 = arith.constant 0 : index
    %1 = vector.load %arg1[%c0_1, %c0_2] : memref<16x128xf32, #tpu.memory_space<vmem>>, vector<16x128xf32>
    %cst = arith.constant dense<0.000000e+00> : vector<16x128xf32>
    %2 = tpu.matmul %0, %1, %cst {dimension_numbers = #tpu.dot_dimension_numbers<[1], [0], [0], [1], [0, 0, 1, 1], [], []>} : vector<16x16xf32>, vector<16x128xf32>, vector<16x128xf32> -> vector<16x128xf32>
    %c0_3 = arith.constant 0 : index
    %c0_4 = arith.constant 0 : index
    %3 = vector.load %arg3[%c0_3, %c0_4] : memref<1x128xf32, #tpu.memory_space<vmem>>, vector<1x128xf32>
    %4 = vector.broadcast %3 : vector<1x128xf32> to vector<16x128xf32>
    %5 = arith.addf %2, %4 : vector<16x128xf32>
    %c0_5 = arith.constant 0 : index
    %c0_6 = arith.constant 0 : index
    %6 = vector.load %arg2[%c0_5, %c0_6] : memref<32x128xf32, #tpu.memory_space<vmem>>, vector<32x128xf32>
    %cst_7 = arith.constant 0.000000e+00 : f32
    %7 = vector.broadcast %cst_7 : f32 to vector<2x32xf32>
    %cst_8 = arith.constant 0.000000e+00 : f32
    %8 = vector.broadcast %cst_8 : f32 to vector<2x32xf32>
    %9 = vector.extract_strided_slice %5 {offsets = [0, 0], sizes = [2, 128], strides = [1, 1]} : vector<16x128xf32> to vector<2x128xf32>
    %cst_9 = arith.constant dense<0.000000e+00> : vector<2x128xf32>
    %10 = tpu.matmul %7, %6, %cst_9 {dimension_numbers = #tpu.dot_dimension_numbers<[1], [0], [0], [1], [0, 0, 1, 1], [], []>} : vector<2x32xf32>, vector<32x128xf32>, vector<2x128xf32> -> vector<2x128xf32>
    %11 = arith.addf %9, %10 : vector<2x128xf32>
    %12 = arith.negf %11 : vector<2x128xf32>
    %13 = math.exp %12 : vector<2x128xf32>
    %cst_10 = arith.constant 1.000000e+00 : f32
    %14 = vector.broadcast %cst_10 : f32 to vector<2x128xf32>
    %15 = arith.addf %14, %13 : vector<2x128xf32>
    %16 = arith.divf %14, %15 : vector<2x128xf32>
    %17 = math.tanh %11 : vector<2x128xf32>
    %18 = vector.extract_strided_slice %16 {offsets = [0, 0], sizes = [2, 32], strides = [1, 1]} : vector<2x128xf32> to vector<2x32xf32>
    %19 = vector.extract_strided_slice %16 {offsets = [0, 32], sizes = [2, 32], strides = [1, 1]} : vector<2x128xf32> to vector<2x32xf32>
    %20 = vector.extract_strided_slice %16 {offsets = [0, 96], sizes = [2, 32], strides = [1, 1]} : vector<2x128xf32> to vector<2x32xf32>
    %21 = vector.extract_strided_slice %17 {offsets = [0, 64], sizes = [2, 32], strides = [1, 1]} : vector<2x128xf32> to vector<2x32xf32>
    %22 = arith.mulf %19, %8 : vector<2x32xf32>
    %23 = arith.mulf %18, %21 : vector<2x32xf32>
    %24 = arith.addf %22, %23 : vector<2x32xf32>
    %25 = math.tanh %24 : vector<2x32xf32>
    %26 = arith.mulf %20, %25 : vector<2x32xf32>
    %27 = vector.extract_strided_slice %5 {offsets = [2, 0], sizes = [2, 128], strides = [1, 1]} : vector<16x128xf32> to vector<2x128xf32>
    %cst_11 = arith.constant dense<0.000000e+00> : vector<2x128xf32>
    %28 = tpu.matmul %26, %6, %cst_11 {dimension_numbers = #tpu.dot_dimension_numbers<[1], [0], [0], [1], [0, 0, 1, 1], [], []>} : vector<2x32xf32>, vector<32x128xf32>, vector<2x128xf32> -> vector<2x128xf32>
    %29 = arith.addf %27, %28 : vector<2x128xf32>
    %30 = arith.negf %29 : vector<2x128xf32>
    %31 = math.exp %30 : vector<2x128xf32>
    %cst_12 = arith.constant 1.000000e+00 : f32
    %32 = vector.broadcast %cst_12 : f32 to vector<2x128xf32>
    %33 = arith.addf %32, %31 : vector<2x128xf32>
    %34 = arith.divf %32, %33 : vector<2x128xf32>
    %35 = math.tanh %29 : vector<2x128xf32>
    %36 = vector.extract_strided_slice %34 {offsets = [0, 0], sizes = [2, 32], strides = [1, 1]} : vector<2x128xf32> to vector<2x32xf32>
    %37 = vector.extract_strided_slice %34 {offsets = [0, 32], sizes = [2, 32], strides = [1, 1]} : vector<2x128xf32> to vector<2x32xf32>
    %38 = vector.extract_strided_slice %34 {offsets = [0, 96], sizes = [2, 32], strides = [1, 1]} : vector<2x128xf32> to vector<2x32xf32>
    %39 = vector.extract_strided_slice %35 {offsets = [0, 64], sizes = [2, 32], strides = [1, 1]} : vector<2x128xf32> to vector<2x32xf32>
    %40 = arith.mulf %37, %24 : vector<2x32xf32>
    %41 = arith.mulf %36, %39 : vector<2x32xf32>
    %42 = arith.addf %40, %41 : vector<2x32xf32>
    %43 = math.tanh %42 : vector<2x32xf32>
    %44 = arith.mulf %38, %43 : vector<2x32xf32>
    %45 = vector.extract_strided_slice %5 {offsets = [4, 0], sizes = [2, 128], strides = [1, 1]} : vector<16x128xf32> to vector<2x128xf32>
    %cst_13 = arith.constant dense<0.000000e+00> : vector<2x128xf32>
    %46 = tpu.matmul %44, %6, %cst_13 {dimension_numbers = #tpu.dot_dimension_numbers<[1], [0], [0], [1], [0, 0, 1, 1], [], []>} : vector<2x32xf32>, vector<32x128xf32>, vector<2x128xf32> -> vector<2x128xf32>
    %47 = arith.addf %45, %46 : vector<2x128xf32>
    %48 = arith.negf %47 : vector<2x128xf32>
    %49 = math.exp %48 : vector<2x128xf32>
    %cst_14 = arith.constant 1.000000e+00 : f32
    %50 = vector.broadcast %cst_14 : f32 to vector<2x128xf32>
    %51 = arith.addf %50, %49 : vector<2x128xf32>
    %52 = arith.divf %50, %51 : vector<2x128xf32>
    %53 = math.tanh %47 : vector<2x128xf32>
    %54 = vector.extract_strided_slice %52 {offsets = [0, 0], sizes = [2, 32], strides = [1, 1]} : vector<2x128xf32> to vector<2x32xf32>
    %55 = vector.extract_strided_slice %52 {offsets = [0, 32], sizes = [2, 32], strides = [1, 1]} : vector<2x128xf32> to vector<2x32xf32>
    %56 = vector.extract_strided_slice %52 {offsets = [0, 96], sizes = [2, 32], strides = [1, 1]} : vector<2x128xf32> to vector<2x32xf32>
    %57 = vector.extract_strided_slice %53 {offsets = [0, 64], sizes = [2, 32], strides = [1, 1]} : vector<2x128xf32> to vector<2x32xf32>
    %58 = arith.mulf %55, %42 : vector<2x32xf32>
    %59 = arith.mulf %54, %57 : vector<2x32xf32>
    %60 = arith.addf %58, %59 : vector<2x32xf32>
    %61 = math.tanh %60 : vector<2x32xf32>
    %62 = arith.mulf %56, %61 : vector<2x32xf32>
    %63 = vector.extract_strided_slice %5 {offsets = [6, 0], sizes = [2, 128], strides = [1, 1]} : vector<16x128xf32> to vector<2x128xf32>
    %cst_15 = arith.constant dense<0.000000e+00> : vector<2x128xf32>
    %64 = tpu.matmul %62, %6, %cst_15 {dimension_numbers = #tpu.dot_dimension_numbers<[1], [0], [0], [1], [0, 0, 1, 1], [], []>} : vector<2x32xf32>, vector<32x128xf32>, vector<2x128xf32> -> vector<2x128xf32>
    %65 = arith.addf %63, %64 : vector<2x128xf32>
    %66 = arith.negf %65 : vector<2x128xf32>
    %67 = math.exp %66 : vector<2x128xf32>
    %cst_16 = arith.constant 1.000000e+00 : f32
    %68 = vector.broadcast %cst_16 : f32 to vector<2x128xf32>
    %69 = arith.addf %68, %67 : vector<2x128xf32>
    %70 = arith.divf %68, %69 : vector<2x128xf32>
    %71 = math.tanh %65 : vector<2x128xf32>
    %72 = vector.extract_strided_slice %70 {offsets = [0, 0], sizes = [2, 32], strides = [1, 1]} : vector<2x128xf32> to vector<2x32xf32>
    %73 = vector.extract_strided_slice %70 {offsets = [0, 32], sizes = [2, 32], strides = [1, 1]} : vector<2x128xf32> to vector<2x32xf32>
    %74 = vector.extract_strided_slice %70 {offsets = [0, 96], sizes = [2, 32], strides = [1, 1]} : vector<2x128xf32> to vector<2x32xf32>
    %75 = vector.extract_strided_slice %71 {offsets = [0, 64], sizes = [2, 32], strides = [1, 1]} : vector<2x128xf32> to vector<2x32xf32>
    %76 = arith.mulf %73, %60 : vector<2x32xf32>
    %77 = arith.mulf %72, %75 : vector<2x32xf32>
    %78 = arith.addf %76, %77 : vector<2x32xf32>
    %79 = math.tanh %78 : vector<2x32xf32>
    %80 = arith.mulf %74, %79 : vector<2x32xf32>
    %81 = vector.extract_strided_slice %5 {offsets = [8, 0], sizes = [2, 128], strides = [1, 1]} : vector<16x128xf32> to vector<2x128xf32>
    %cst_17 = arith.constant dense<0.000000e+00> : vector<2x128xf32>
    %82 = tpu.matmul %80, %6, %cst_17 {dimension_numbers = #tpu.dot_dimension_numbers<[1], [0], [0], [1], [0, 0, 1, 1], [], []>} : vector<2x32xf32>, vector<32x128xf32>, vector<2x128xf32> -> vector<2x128xf32>
    %83 = arith.addf %81, %82 : vector<2x128xf32>
    %84 = arith.negf %83 : vector<2x128xf32>
    %85 = math.exp %84 : vector<2x128xf32>
    %cst_18 = arith.constant 1.000000e+00 : f32
    %86 = vector.broadcast %cst_18 : f32 to vector<2x128xf32>
    %87 = arith.addf %86, %85 : vector<2x128xf32>
    %88 = arith.divf %86, %87 : vector<2x128xf32>
    %89 = math.tanh %83 : vector<2x128xf32>
    %90 = vector.extract_strided_slice %88 {offsets = [0, 0], sizes = [2, 32], strides = [1, 1]} : vector<2x128xf32> to vector<2x32xf32>
    %91 = vector.extract_strided_slice %88 {offsets = [0, 32], sizes = [2, 32], strides = [1, 1]} : vector<2x128xf32> to vector<2x32xf32>
    %92 = vector.extract_strided_slice %88 {offsets = [0, 96], sizes = [2, 32], strides = [1, 1]} : vector<2x128xf32> to vector<2x32xf32>
    %93 = vector.extract_strided_slice %89 {offsets = [0, 64], sizes = [2, 32], strides = [1, 1]} : vector<2x128xf32> to vector<2x32xf32>
    %94 = arith.mulf %91, %78 : vector<2x32xf32>
    %95 = arith.mulf %90, %93 : vector<2x32xf32>
    %96 = arith.addf %94, %95 : vector<2x32xf32>
    %97 = math.tanh %96 : vector<2x32xf32>
    %98 = arith.mulf %92, %97 : vector<2x32xf32>
    %99 = vector.extract_strided_slice %5 {offsets = [10, 0], sizes = [2, 128], strides = [1, 1]} : vector<16x128xf32> to vector<2x128xf32>
    %cst_19 = arith.constant dense<0.000000e+00> : vector<2x128xf32>
    %100 = tpu.matmul %98, %6, %cst_19 {dimension_numbers = #tpu.dot_dimension_numbers<[1], [0], [0], [1], [0, 0, 1, 1], [], []>} : vector<2x32xf32>, vector<32x128xf32>, vector<2x128xf32> -> vector<2x128xf32>
    %101 = arith.addf %99, %100 : vector<2x128xf32>
    %102 = arith.negf %101 : vector<2x128xf32>
    %103 = math.exp %102 : vector<2x128xf32>
    %cst_20 = arith.constant 1.000000e+00 : f32
    %104 = vector.broadcast %cst_20 : f32 to vector<2x128xf32>
    %105 = arith.addf %104, %103 : vector<2x128xf32>
    %106 = arith.divf %104, %105 : vector<2x128xf32>
    %107 = math.tanh %101 : vector<2x128xf32>
    %108 = vector.extract_strided_slice %106 {offsets = [0, 0], sizes = [2, 32], strides = [1, 1]} : vector<2x128xf32> to vector<2x32xf32>
    %109 = vector.extract_strided_slice %106 {offsets = [0, 32], sizes = [2, 32], strides = [1, 1]} : vector<2x128xf32> to vector<2x32xf32>
    %110 = vector.extract_strided_slice %106 {offsets = [0, 96], sizes = [2, 32], strides = [1, 1]} : vector<2x128xf32> to vector<2x32xf32>
    %111 = vector.extract_strided_slice %107 {offsets = [0, 64], sizes = [2, 32], strides = [1, 1]} : vector<2x128xf32> to vector<2x32xf32>
    %112 = arith.mulf %109, %96 : vector<2x32xf32>
    %113 = arith.mulf %108, %111 : vector<2x32xf32>
    %114 = arith.addf %112, %113 : vector<2x32xf32>
    %115 = math.tanh %114 : vector<2x32xf32>
    %116 = arith.mulf %110, %115 : vector<2x32xf32>
    %117 = vector.extract_strided_slice %5 {offsets = [12, 0], sizes = [2, 128], strides = [1, 1]} : vector<16x128xf32> to vector<2x128xf32>
    %cst_21 = arith.constant dense<0.000000e+00> : vector<2x128xf32>
    %118 = tpu.matmul %116, %6, %cst_21 {dimension_numbers = #tpu.dot_dimension_numbers<[1], [0], [0], [1], [0, 0, 1, 1], [], []>} : vector<2x32xf32>, vector<32x128xf32>, vector<2x128xf32> -> vector<2x128xf32>
    %119 = arith.addf %117, %118 : vector<2x128xf32>
    %120 = arith.negf %119 : vector<2x128xf32>
    %121 = math.exp %120 : vector<2x128xf32>
    %cst_22 = arith.constant 1.000000e+00 : f32
    %122 = vector.broadcast %cst_22 : f32 to vector<2x128xf32>
    %123 = arith.addf %122, %121 : vector<2x128xf32>
    %124 = arith.divf %122, %123 : vector<2x128xf32>
    %125 = math.tanh %119 : vector<2x128xf32>
    %126 = vector.extract_strided_slice %124 {offsets = [0, 0], sizes = [2, 32], strides = [1, 1]} : vector<2x128xf32> to vector<2x32xf32>
    %127 = vector.extract_strided_slice %124 {offsets = [0, 32], sizes = [2, 32], strides = [1, 1]} : vector<2x128xf32> to vector<2x32xf32>
    %128 = vector.extract_strided_slice %124 {offsets = [0, 96], sizes = [2, 32], strides = [1, 1]} : vector<2x128xf32> to vector<2x32xf32>
    %129 = vector.extract_strided_slice %125 {offsets = [0, 64], sizes = [2, 32], strides = [1, 1]} : vector<2x128xf32> to vector<2x32xf32>
    %130 = arith.mulf %127, %114 : vector<2x32xf32>
    %131 = arith.mulf %126, %129 : vector<2x32xf32>
    %132 = arith.addf %130, %131 : vector<2x32xf32>
    %133 = math.tanh %132 : vector<2x32xf32>
    %134 = arith.mulf %128, %133 : vector<2x32xf32>
    %135 = vector.extract_strided_slice %5 {offsets = [14, 0], sizes = [2, 128], strides = [1, 1]} : vector<16x128xf32> to vector<2x128xf32>
    %cst_23 = arith.constant dense<0.000000e+00> : vector<2x128xf32>
    %136 = tpu.matmul %134, %6, %cst_23 {dimension_numbers = #tpu.dot_dimension_numbers<[1], [0], [0], [1], [0, 0, 1, 1], [], []>} : vector<2x32xf32>, vector<32x128xf32>, vector<2x128xf32> -> vector<2x128xf32>
    %137 = arith.addf %135, %136 : vector<2x128xf32>
    %138 = arith.negf %137 : vector<2x128xf32>
    %139 = math.exp %138 : vector<2x128xf32>
    %cst_24 = arith.constant 1.000000e+00 : f32
    %140 = vector.broadcast %cst_24 : f32 to vector<2x128xf32>
    %141 = arith.addf %140, %139 : vector<2x128xf32>
    %142 = arith.divf %140, %141 : vector<2x128xf32>
    %143 = math.tanh %137 : vector<2x128xf32>
    %144 = vector.extract_strided_slice %142 {offsets = [0, 0], sizes = [2, 32], strides = [1, 1]} : vector<2x128xf32> to vector<2x32xf32>
    %145 = vector.extract_strided_slice %142 {offsets = [0, 32], sizes = [2, 32], strides = [1, 1]} : vector<2x128xf32> to vector<2x32xf32>
    %146 = vector.extract_strided_slice %142 {offsets = [0, 96], sizes = [2, 32], strides = [1, 1]} : vector<2x128xf32> to vector<2x32xf32>
    %147 = vector.extract_strided_slice %143 {offsets = [0, 64], sizes = [2, 32], strides = [1, 1]} : vector<2x128xf32> to vector<2x32xf32>
    %148 = arith.mulf %145, %132 : vector<2x32xf32>
    %149 = arith.mulf %144, %147 : vector<2x32xf32>
    %150 = arith.addf %148, %149 : vector<2x32xf32>
    %151 = math.tanh %150 : vector<2x32xf32>
    %152 = arith.mulf %146, %151 : vector<2x32xf32>
    %cst_25 = arith.constant 0.000000e+00 : f32
    %153 = vector.broadcast %cst_25 : f32 to vector<2x32xf32>
    %154 = arith.maximumf %152, %153 : vector<2x32xf32>
    %c0_26 = arith.constant 0 : index
    %c0_27 = arith.constant 0 : index
    %155 = vector.load %arg4[%c0_26, %c0_27] : memref<32x32xf32, #tpu.memory_space<vmem>>, vector<32x32xf32>
    %cst_28 = arith.constant dense<0.000000e+00> : vector<2x32xf32>
    %156 = tpu.matmul %154, %155, %cst_28 {dimension_numbers = #tpu.dot_dimension_numbers<[1], [0], [0], [1], [0, 0, 1, 1], [], []>} : vector<2x32xf32>, vector<32x32xf32>, vector<2x32xf32> -> vector<2x32xf32>
    %c0_29 = arith.constant 0 : index
    %c0_30 = arith.constant 0 : index
    %157 = vector.load %arg5[%c0_29, %c0_30] : memref<1x32xf32, #tpu.memory_space<vmem>>, vector<1x32xf32>
    %158 = vector.broadcast %157 : vector<1x32xf32> to vector<2x32xf32>
    %159 = arith.addf %156, %158 : vector<2x32xf32>
    %cst_31 = arith.constant 0.000000e+00 : f32
    %160 = vector.broadcast %cst_31 : f32 to vector<2x32xf32>
    %161 = arith.maximumf %159, %160 : vector<2x32xf32>
    %c0_32 = arith.constant 0 : index
    %c0_33 = arith.constant 0 : index
    %162 = vector.load %arg6[%c0_32, %c0_33] : memref<32x32xf32, #tpu.memory_space<vmem>>, vector<32x32xf32>
    %cst_34 = arith.constant dense<0.000000e+00> : vector<2x32xf32>
    %163 = tpu.matmul %161, %162, %cst_34 {dimension_numbers = #tpu.dot_dimension_numbers<[1], [0], [0], [1], [0, 0, 1, 1], [], []>} : vector<2x32xf32>, vector<32x32xf32>, vector<2x32xf32> -> vector<2x32xf32>
    %c0_35 = arith.constant 0 : index
    %c0_36 = arith.constant 0 : index
    %164 = vector.load %arg7[%c0_35, %c0_36] : memref<1x32xf32, #tpu.memory_space<vmem>>, vector<1x32xf32>
    %165 = vector.broadcast %164 : vector<1x32xf32> to vector<2x32xf32>
    %166 = arith.addf %163, %165 : vector<2x32xf32>
    %cst_37 = arith.constant 0.000000e+00 : f32
    %167 = vector.broadcast %cst_37 : f32 to vector<2x32xf32>
    %168 = arith.maximumf %166, %167 : vector<2x32xf32>
    %c0_38 = arith.constant 0 : index
    %c0_39 = arith.constant 0 : index
    %169 = vector.load %arg8[%c0_38, %c0_39] : memref<32x16xf32, #tpu.memory_space<vmem>>, vector<32x16xf32>
    %cst_40 = arith.constant dense<0.000000e+00> : vector<2x16xf32>
    %170 = tpu.matmul %168, %169, %cst_40 {dimension_numbers = #tpu.dot_dimension_numbers<[1], [0], [0], [1], [0, 0, 1, 1], [], []>} : vector<2x32xf32>, vector<32x16xf32>, vector<2x16xf32> -> vector<2x16xf32>
    %c0_41 = arith.constant 0 : index
    %c0_42 = arith.constant 0 : index
    %171 = vector.load %arg9[%c0_41, %c0_42] : memref<1x16xf32, #tpu.memory_space<vmem>>, vector<1x16xf32>
    %172 = vector.broadcast %171 : vector<1x16xf32> to vector<2x16xf32>
    %173 = arith.addf %170, %172 : vector<2x16xf32>
    %cst_43 = arith.constant 0.000000e+00 : f32
    %174 = vector.broadcast %cst_43 : f32 to vector<2x16xf32>
    %175 = arith.maximumf %173, %174 : vector<2x16xf32>
    %c0_44 = arith.constant 0 : index
    %c0_45 = arith.constant 0 : index
    %176 = vector.load %arg10[%c0_44, %c0_45] : memref<16x4xf32, #tpu.memory_space<vmem>>, vector<16x4xf32>
    %cst_46 = arith.constant dense<0.000000e+00> : vector<2x4xf32>
    %177 = tpu.matmul %175, %176, %cst_46 {dimension_numbers = #tpu.dot_dimension_numbers<[1], [0], [0], [1], [0, 0, 1, 1], [], []>} : vector<2x16xf32>, vector<16x4xf32>, vector<2x4xf32> -> vector<2x4xf32>
    %c0_47 = arith.constant 0 : index
    %c0_48 = arith.constant 0 : index
    %178 = vector.load %arg11[%c0_47, %c0_48] : memref<1x4xf32, #tpu.memory_space<vmem>>, vector<1x4xf32>
    %179 = vector.broadcast %178 : vector<1x4xf32> to vector<2x4xf32>
    %180 = arith.addf %177, %179 : vector<2x4xf32>
    %c0_49 = arith.constant 0 : index
    %c0_50 = arith.constant 0 : index
    %181 = vector.load %arg12[%c0_49, %c0_50] : memref<2x4xf32, #tpu.memory_space<vmem>>, vector<2x4xf32>
    tpu.vector_store %arg12[%c0_49, %c0_50], %180 {strides = array<i32>} : memref<2x4xf32, #tpu.memory_space<vmem>>, vector<2x4xf32>,
    return
  }
}

</mosaic_0001>

<llo_original>
// kernel: emotion_classifier_forward.1
$region0: #{emotion_classifier_forward.1}
  #allocation0 [shape = 'u32[]', space=smem, size = 0x4, offset = 0x4, fixed_abs, tag = 'smem constant byte address 0x4 - core index']
  #allocation1 [shape = 'u32[72,128]{1,0:T(1,128)}', space=vmem, size = 0x9000, scoped, tag = 'internal scratch']
  %s0 = inlined_call_operand.vmem [shape: f32[16,16], index: 0, kind: input, shape index: {}]
  %s1 = inlined_call_operand.vmem [shape: f32[16,128], index: 1, kind: input, shape index: {}]
  %s2 = inlined_call_operand.vmem [shape: f32[32,128], index: 2, kind: input, shape index: {}]
  %s3 = inlined_call_operand.vmem [shape: f32[1,128], index: 3, kind: input, shape index: {}]
  %s4 = inlined_call_operand.vmem [shape: f32[32,32], index: 4, kind: input, shape index: {}]
  %s5 = inlined_call_operand.vmem [shape: f32[1,32], index: 5, kind: input, shape index: {}]
  %s6 = inlined_call_operand.hbm [shape: f32[32,32], index: 6, kind: input, shape index: {}]
  %s7 = inlined_call_operand.vmem [shape: f32[1,32], index: 7, kind: input, shape index: {}]
  %s8 = inlined_call_operand.vmem [shape: f32[32,16], index: 8, kind: input, shape index: {}]
  %s9 = inlined_call_operand.vmem [shape: f32[1,16], index: 9, kind: input, shape index: {}]
  %s10 = inlined_call_operand.vmem [shape: f32[16,4], index: 10, kind: input, shape index: {}]
  %s11 = inlined_call_operand.vmem [shape: f32[1,4], index: 11, kind: input, shape index: {}]
  %s12 = inlined_call_operand.hbm [shape: f32[2,4], index: 12, kind: output, shape index: {}]
  %s13 = sld [smem:[#allocation0]]
  $region62: #{emotion_classifier_forward.1} parent=0
    _
  %s15 = ssub.s32 1, %s13
  %s16 = scalar_select 0, %s15, %s13
  $region1: #{emotion_classifier_forward.1} parent=0
    #allocation2 [shape = 'u8[16384]{0}', space=vmem, size = 0x4000, scoped, tag = 'input window, operand 6, single buffered']
    #allocation3 [shape = 's32[1]{0}', space=sflag, size = 0x4, scoped, tag = 'scoped memory for emotion_classifier_forward.1']
    #allocation4 [shape = 's32[1]{0}', space=sflag, size = 0x4, scoped, tag = 'scoped memory for emotion_classifier_forward.1']
    #allocation5 [shape = 'u8[1024]{0}', space=vmem, size = 0x400, scoped, tag = 'output window, operand 0, single buffered']
    %17 = vsyncpa [#allocation3], 0
    %18 = vsyncpa [#allocation4], 0
    // Predicated region
    $region2: #{emotion_classifier_forward.1} parent=1 // pred_check
      _
    $region3: #{emotion_classifier_forward.1} parent=1 // pred_check_branch
      %20 = sbr.rel (0) target = $region5
    $region4: #{emotion_classifier_forward.1} parent=1 // pred_region
      _
    $region5: #{emotion_classifier_forward.1} parent=1 // pred_fallthru
      _
    // Predicated region
    $region6: #{emotion_classifier_forward.1} parent=1 // pred_check
      _
    $region7: #{emotion_classifier_forward.1} parent=1 // pred_check_branch
      %22 = sbr.rel (0) target = $region9
    $region8: #{emotion_classifier_forward.1} parent=1 // pred_region
      _
    $region9: #{emotion_classifier_forward.1} parent=1 // pred_fallthru
      _
    // Predicated region
    $region10: #{emotion_classifier_forward.1} parent=1 // pred_check
      _
    $region11: #{emotion_classifier_forward.1} parent=1 // pred_check_branch
      %24 = sbr.rel (0) target = $region13
    $region12: #{emotion_classifier_forward.1} parent=1 // pred_region
      _
    $region13: #{emotion_classifier_forward.1} parent=1 // pred_fallthru
      _
    // Predicated region
    $region14: #{emotion_classifier_forward.1} parent=1 // pred_check
      _
    $region15: #{emotion_classifier_forward.1} parent=1 // pred_check_branch
      %26 = sbr.rel (0) target = $region17
    $region16: #{emotion_classifier_forward.1} parent=1 // pred_region
      _
    $region17: #{emotion_classifier_forward.1} parent=1 // pred_fallthru
      _
    // Predicated region
    $region18: #{emotion_classifier_forward.1} parent=1 // pred_check
      _
    $region19: #{emotion_classifier_forward.1} parent=1 // pred_check_branch
      %28 = sbr.rel (0) target = $region21
    $region20: #{emotion_classifier_forward.1} parent=1 // pred_region
      _
    $region21: #{emotion_classifier_forward.1} parent=1 // pred_fallthru
      _
    // Predicated region
    $region22: #{emotion_classifier_forward.1} parent=1 // pred_check
      _
    $region23: #{emotion_classifier_forward.1} parent=1 // pred_check_branch
      %30 = sbr.rel (0) target = $region25
    $region24: #{emotion_classifier_forward.1} parent=1 // pred_region
      _
    $region25: #{emotion_classifier_forward.1} parent=1 // pred_fallthru
      _
    // Predicated region
    $region26: #{emotion_classifier_forward.1} parent=1 // pred_check
      _
    $region27: #{emotion_classifier_forward.1} parent=1 // pred_check_branch
      %32 = sbr.rel (0) target = $region29
    $region28: #{emotion_classifier_forward.1} parent=1 // pred_region
      %34 = vsyncadd [#allocation3], 0
      %s35 = sshll.u32 %s6, 4
      %s36 = int_to_ptr.hbm [resolvable:$true] %s35
      %s37 = sshll.u32 [#allocation2], 4
      %s38 = int_to_ptr.vmem [resolvable:$true] %s37
      %43 = dma.hbm_to_vmem [thread:$0]  %s36, 512, %s38, [#allocation3], 128, 128, 8
    $region29: #{emotion_classifier_forward.1} parent=1 // pred_fallthru
      _
    // Predicated region
    $region30: #{emotion_classifier_forward.1} parent=1 // pred_check
      _
    $region31: #{emotion_classifier_forward.1} parent=1 // pred_check_branch
      %45 = sbr.rel (0) target = $region33
    $region32: #{emotion_classifier_forward.1} parent=1 // pred_region
      _
    $region33: #{emotion_classifier_forward.1} parent=1 // pred_fallthru
      _
    // Predicated region
    $region34: #{emotion_classifier_forward.1} parent=1 // pred_check
      _
    $region35: #{emotion_classifier_forward.1} parent=1 // pred_check_branch
      %47 = sbr.rel (0) target = $region37
    $region36: #{emotion_classifier_forward.1} parent=1 // pred_region
      _
    $region37: #{emotion_classifier_forward.1} parent=1 // pred_fallthru
      _
    // Predicated region
    $region38: #{emotion_classifier_forward.1} parent=1 // pred_check
      _
    $region39: #{emotion_classifier_forward.1} parent=1 // pred_check_branch
      %49 = sbr.rel (0) target = $region41
    $region40: #{emotion_classifier_forward.1} parent=1 // pred_region
      _
    $region41: #{emotion_classifier_forward.1} parent=1 // pred_fallthru
      _
    // Predicated region
    $region42: #{emotion_classifier_forward.1} parent=1 // pred_check
      _
    $region43: #{emotion_classifier_forward.1} parent=1 // pred_check_branch
      %51 = sbr.rel (0) target = $region45
    $region44: #{emotion_classifier_forward.1} parent=1 // pred_region
      _
    $region45: #{emotion_classifier_forward.1} parent=1 // pred_fallthru
      _
    // Predicated region
    $region46: #{emotion_classifier_forward.1} parent=1 // pred_check
      _
    $region47: #{emotion_classifier_forward.1} parent=1 // pred_check_branch
      %53 = sbr.rel (0) target = $region49
    $region48: #{emotion_classifier_forward.1} parent=1 // pred_region
      _
    $region49: #{emotion_classifier_forward.1} parent=1 // pred_fallthru
      _
    // Predicated region
    $region50: #{emotion_classifier_forward.1} parent=1 // pred_check
      _
    $region51: #{emotion_classifier_forward.1} parent=1 // pred_check_branch
      %55 = sbr.rel (0) target = $region53
    $region52: #{emotion_classifier_forward.1} parent=1 // pred_region
      %57 = dma.done [#allocation3], 512
    $region53: #{emotion_classifier_forward.1} parent=1 // pred_fallthru
      _
    %v58 = vld [vmem:[%s0] sm:$0xff]
    %v59 = vld [vmem:[%s0 + $0x8] sm:$0xff]
    %v60 = vld [vmem:[%s1] sm:$0xff]
    %v61 = vld [vmem:[%s1 + $0x8] sm:$0xff]
    %v62 = vld [vmem:[%s3] sm:$0x1]
    %v64 = vperm.slane %v62, 0
    %vm66 = vcmask 130048
    %v68 = vsel %vm66, %v58, 0
    %v71 = vsel %vm66, %v59, 0
    %73 = vmatpush.msra.mxu0 0.0
    %74 = vmatpush.msra.mxu0 0.0
    %75 = vmatpush.msra.mxu0 0.0
    %76 = vmatpush.msra.mxu0 0.0
    %77 = vmatpush.msra.mxu0 0.0
    %78 = vmatpush.msra.mxu0 0.0
    %79 = vmatpush.msra.mxu0 0.0
    %80 = vmatpush.msra.mxu0 0.0
    %81 = vmatpush.msra.mxu0 0.0
    %82 = vmatpush.msra.mxu0 0.0
    %83 = vmatpush.msra.mxu0 0.0
    %84 = vmatpush.msra.mxu0 0.0
    %85 = vmatpush.msra.mxu0 0.0
    %86 = vmatpush.msra.mxu0 0.0
    %87 = vmatpush.msra.mxu0 %v61
    %88 = vmatpush.msra.mxu0 %v60
    %89 = vmatmul.f32.gmra.mxu0 %v68
    %v90 = vpop.f32.mrf.mxu0
    %v91 = vadd.f32 %v64, %v90
    %92 = vmatmul.f32.gmra.mxu0 %v71
    %v93 = vpop.f32.mrf.mxu0
    %v94 = vadd.f32 %v64, %v93
    %95 = vdwg.mxu0
    %v96 = vld [vmem:[%s2] sm:$0xff]
    %v97 = vld [vmem:[%s2 + $0x8] sm:$0xff]
    %v98 = vld [vmem:[%s2 + $0x10] sm:$0xff]
    %v99 = vld [vmem:[%s2 + $0x18] sm:$0xff]
    %vm100 = vcmask 261120
    %v102 = vsel %vm100, 0.0, 0
    %104 = vmatpush.msra.mxu0 0.0
    %105 = vmatpush.msra.mxu0 0.0
    %106 = vmatpush.msra.mxu0 0.0
    %107 = vmatpush.msra.mxu0 0.0
    %108 = vmatpush.msra.mxu0 0.0
    %109 = vmatpush.msra.mxu0 0.0
    %110 = vmatpush.msra.mxu0 0.0
    %111 = vmatpush.msra.mxu0 0.0
    %112 = vmatpush.msra.mxu0 0.0
    %113 = vmatpush.msra.mxu0 0.0
    %114 = vmatpush.msra.mxu0 0.0
    %115 = vmatpush.msra.mxu0 0.0
    %116 = vmatpush.msra.mxu0 %v99
    %117 = vmatpush.msra.mxu0 %v98
    %118 = vmatpush.msra.mxu0 %v97
    %119 = vmatpush.msra.mxu0 %v96
    %120 = vmatmul.f32.gmra.mxu0 %v102
    %v121 = vpop.f32.mrf.mxu0
    %v122 = vadd.f32 0.0, %v121
    %123 = vdwg.mxu0
    %v124 = vadd.f32 %v91, %v122
    %v125 = vxor.u32 %v124, 2147483648
    %v126 = vmul.f32 %v125, 1.442695
    %v127 = vpow.pop %v126
    %v128 = vadd.f32 %v127, 1.0
    %v129 = vrcp.pop %v128
    %v130 = vmul.f32 %v128, %v129
    %v131 = vsub.f32 1.0, %v130
    %v132 = vmul.f32 %v129, %v131
    %v133 = vadd.f32 %v129, %v132
    %vm134 = vweird.f32 %v128
    %vm135 = vweird.f32 %v129
    %vm136 = vmor %vm134, %vm135
    %v137 = vsel %vm136, %v129, %v133
    %v138 = vand.u32 2147483647, %v128
    %vm139 = vcmp.eq.f32.partialorder %v138, 8.507059e+37
    %v140 = vand.u32 %v128, 2147483648
    %v141 = vor.u32 1.1754944e-38, %v140
    %v142 = vsel %vm139, %v141, %v137
    %v143 = vmul.f32 1.0, %v142
    %v144 = vtanh.pop %v124
    %v145 = vmul.f32 %v143, 0.0
    %147 = vrot.lane.b32.xlu0 %v144, 64
    %v148 = vpop.permute.xlu0 %147
    %v150 = vmul.f32 %v143, %v148
    %152 = vrot.lane.b32.xlu0 %v150, 32
    %v153 = vpop.permute.xlu0 %152
    %v155 = vadd.f32 %v145, %v153
    %v156 = vtanh.pop %v155
    %158 = vrot.lane.b32.xlu0 %v156, 64
    %v159 = vpop.permute.xlu0 %158
    %v161 = vmul.f32 %v143, %v159
    %163 = vrot.lane.b32.xlu0 %v161, 32
    %v164 = vpop.permute.xlu0 %163
    %v165 = vsel %vm100, %v164, 0
    %167 = vmatpush.msra.mxu0 0.0
    %168 = vmatpush.msra.mxu0 0.0
    %169 = vmatpush.msra.mxu0 0.0
    %170 = vmatpush.msra.mxu0 0.0
    %171 = vmatpush.msra.mxu0 0.0
    %172 = vmatpush.msra.mxu0 0.0
    %173 = vmatpush.msra.mxu0 0.0
    %174 = vmatpush.msra.mxu0 0.0
    %175 = vmatpush.msra.mxu0 0.0
    %176 = vmatpush.msra.mxu0 0.0
    %177 = vmatpush.msra.mxu0 0.0
    %178 = vmatpush.msra.mxu0 0.0
    %179 = vmatpush.msra.mxu0 %v99
    %180 = vmatpush.msra.mxu0 %v98
    %181 = vmatpush.msra.mxu0 %v97
    %182 = vmatpush.msra.mxu0 %v96
    %183 = vmatmul.f32.gmra.mxu0 %v165
    %v184 = vpop.f32.mrf.mxu0
    %v185 = vadd.f32 0.0, %v184
    %186 = vdwg.mxu0
    %v188 = vrot.slane %v185, 6
    %v190 = vadd.f32 %v91, %v188
    %v191 = vxor.u32 %v190, 2147483648
    %v192 = vmul.f32 %v191, 1.442695
    %v193 = vpow.pop %v192
    %v194 = vadd.f32 %v193, 1.0
    %v195 = vrcp.pop %v194
    %v196 = vmul.f32 %v194, %v195
    %v197 = vsub.f32 1.0, %v196
    %v198 = vmul.f32 %v195, %v197
    %v199 = vadd.f32 %v195, %v198
    %vm200 = vweird.f32 %v194
    %vm201 = vweird.f32 %v195
    %vm202 = vmor %vm200, %vm201
    %v203 = vsel %vm202, %v195, %v199
    %v204 = vand.u32 2147483647, %v194
    %vm205 = vcmp.eq.f32.partialorder %v204, 8.507059e+37
    %v206 = vand.u32 %v194, 2147483648
    %v207 = vor.u32 1.1754944e-38, %v206
    %v208 = vsel %vm205, %v207, %v203
    %v209 = vmul.f32 1.0, %v208
    %v210 = vtanh.pop %v190
    %v212 = vrot.slane %v155, 6
    %v214 = vmul.f32 %v209, %v212
    %216 = vrot.lane.b32.xlu0 %v210, 64
    %v217 = vpop.permute.xlu0 %216
    %v219 = vmul.f32 %v209, %v217
    %221 = vrot.lane.b32.xlu0 %v219, 32
    %v222 = vpop.permute.xlu0 %221
    %v224 = vadd.f32 %v214, %v222
    %v225 = vtanh.pop %v224
    %227 = vrot.lane.b32.xlu0 %v225, 64
    %v228 = vpop.permute.xlu0 %227
    %v230 = vmul.f32 %v209, %v228
    %v232 = vrot.slane %v230, 2
    %233 = vrot.lane.b32.xlu0 %v232, 32
    %v234 = vpop.permute.xlu0 %233
    %v235 = vsel %vm100, %v234, 0
    %237 = vmatpush.msra.mxu0 0.0
    %238 = vmatpush.msra.mxu0 0.0
    %239 = vmatpush.msra.mxu0 0.0
    %240 = vmatpush.msra.mxu0 0.0
    %241 = vmatpush.msra.mxu0 0.0
    %242 = vmatpush.msra.mxu0 0.0
    %243 = vmatpush.msra.mxu0 0.0
    %244 = vmatpush.msra.mxu0 0.0
    %245 = vmatpush.msra.mxu0 0.0
    %246 = vmatpush.msra.mxu0 0.0
    %247 = vmatpush.msra.mxu0 0.0
    %248 = vmatpush.msra.mxu0 0.0
    %249 = vmatpush.msra.mxu0 %v99
    %250 = vmatpush.msra.mxu0 %v98
    %251 = vmatpush.msra.mxu0 %v97
    %252 = vmatpush.msra.mxu0 %v96
    %253 = vmatmul.f32.gmra.mxu0 %v235
    %v254 = vpop.f32.mrf.mxu0
    %v255 = vadd.f32 0.0, %v254
    %256 = vdwg.mxu0
    %v258 = vrot.slane %v255, 4
    %v260 = vadd.f32 %v91, %v258
    %v261 = vxor.u32 %v260, 2147483648
    %v262 = vmul.f32 %v261, 1.442695
    %v263 = vpow.pop %v262
    %v264 = vadd.f32 %v263, 1.0
    %v265 = vrcp.pop %v264
    %v266 = vmul.f32 %v264, %v265
    %v267 = vsub.f32 1.0, %v266
    %v268 = vmul.f32 %v265, %v267
    %v269 = vadd.f32 %v265, %v268
    %vm270 = vweird.f32 %v264
    %vm271 = vweird.f32 %v265
    %vm272 = vmor %vm270, %vm271
    %v273 = vsel %vm272, %v265, %v269
    %v274 = vand.u32 2147483647, %v264
    %vm275 = vcmp.eq.f32.partialorder %v274, 8.507059e+37
    %v276 = vand.u32 %v264, 2147483648
    %v277 = vor.u32 1.1754944e-38, %v276
    %v278 = vsel %vm275, %v277, %v273
    %v279 = vmul.f32 1.0, %v278
    %v280 = vtanh.pop %v260
    %v282 = vrot.slane %v224, 6
    %v284 = vmul.f32 %v279, %v282
    %286 = vrot.lane.b32.xlu0 %v280, 64
    %v287 = vpop.permute.xlu0 %286
    %v289 = vmul.f32 %v279, %v287
    %291 = vrot.lane.b32.xlu0 %v289, 32
    %v292 = vpop.permute.xlu0 %291
    %v294 = vadd.f32 %v284, %v292
    %v295 = vtanh.pop %v294
    %297 = vrot.lane.b32.xlu0 %v295, 64
    %v298 = vpop.permute.xlu0 %297
    %v300 = vmul.f32 %v279, %v298
    %v302 = vrot.slane %v300, 4
    %303 = vrot.lane.b32.xlu0 %v302, 32
    %v304 = vpop.permute.xlu0 %303
    %v305 = vsel %vm100, %v304, 0
    %307 = vmatpush.msra.mxu0 0.0
    %308 = vmatpush.msra.mxu0 0.0
    %309 = vmatpush.msra.mxu0 0.0
    %310 = vmatpush.msra.mxu0 0.0
    %311 = vmatpush.msra.mxu0 0.0
    %312 = vmatpush.msra.mxu0 0.0
    %313 = vmatpush.msra.mxu0 0.0
    %314 = vmatpush.msra.mxu0 0.0
    %315 = vmatpush.msra.mxu0 0.0
    %316 = vmatpush.msra.mxu0 0.0
    %317 = vmatpush.msra.mxu0 0.0
    %318 = vmatpush.msra.mxu0 0.0
    %319 = vmatpush.msra.mxu0 %v99
    %320 = vmatpush.msra.mxu0 %v98
    %321 = vmatpush.msra.mxu0 %v97
    %322 = vmatpush.msra.mxu0 %v96
    %323 = vmatmul.f32.gmra.mxu0 %v305
    %v324 = vpop.f32.mrf.mxu0
    %v325 = vadd.f32 0.0, %v324
    %326 = vdwg.mxu0
    %v328 = vrot.slane %v325, 2
    %v330 = vadd.f32 %v91, %v328
    %v331 = vxor.u32 %v330, 2147483648
    %v332 = vmul.f32 %v331, 1.442695
    %v333 = vpow.pop %v332
    %v334 = vadd.f32 %v333, 1.0
    %v335 = vrcp.pop %v334
    %v336 = vmul.f32 %v334, %v335
    %v337 = vsub.f32 1.0, %v336
    %v338 = vmul.f32 %v335, %v337
    %v339 = vadd.f32 %v335, %v338
    %vm340 = vweird.f32 %v334
    %vm341 = vweird.f32 %v335
    %vm342 = vmor %vm340, %vm341
    %v343 = vsel %vm342, %v335, %v339
    %v344 = vand.u32 2147483647, %v334
    %vm345 = vcmp.eq.f32.partialorder %v344, 8.507059e+37
    %v346 = vand.u32 %v334, 2147483648
    %v347 = vor.u32 1.1754944e-38, %v346
    %v348 = vsel %vm345, %v347, %v343
    %v349 = vmul.f32 1.0, %v348
    %v350 = vtanh.pop %v330
    %v352 = vrot.slane %v294, 6
    %v354 = vmul.f32 %v349, %v352
    %356 = vrot.lane.b32.xlu0 %v350, 64
    %v357 = vpop.permute.xlu0 %356
    %v359 = vmul.f32 %v349, %v357
    %361 = vrot.lane.b32.xlu0 %v359, 32
    %v362 = vpop.permute.xlu0 %361
    %v364 = vadd.f32 %v354, %v362
    %v365 = vtanh.pop %v364
    %367 = vrot.lane.b32.xlu0 %v365, 64
    %v368 = vpop.permute.xlu0 %367
    %v370 = vmul.f32 %v349, %v368
    %v372 = vrot.slane %v370, 6
    %373 = vrot.lane.b32.xlu0 %v372, 32
    %v374 = vpop.permute.xlu0 %373
    %v375 = vsel %vm100, %v374, 0
    %377 = vmatpush.msra.mxu0 0.0
    %378 = vmatpush.msra.mxu0 0.0
    %379 = vmatpush.msra.mxu0 0.0
    %380 = vmatpush.msra.mxu0 0.0
    %381 = vmatpush.msra.mxu0 0.0
    %382 = vmatpush.msra.mxu0 0.0
    %383 = vmatpush.msra.mxu0 0.0
    %384 = vmatpush.msra.mxu0 0.0
    %385 = vmatpush.msra.mxu0 0.0
    %386 = vmatpush.msra.mxu0 0.0
    %387 = vmatpush.msra.mxu0 0.0
    %388 = vmatpush.msra.mxu0 0.0
    %389 = vmatpush.msra.mxu0 %v99
    %390 = vmatpush.msra.mxu0 %v98
    %391 = vmatpush.msra.mxu0 %v97
    %392 = vmatpush.msra.mxu0 %v96
    %393 = vmatmul.f32.gmra.mxu0 %v375
    %v394 = vpop.f32.mrf.mxu0
    %v395 = vadd.f32 0.0, %v394
    %396 = vdwg.mxu0
    %v397 = vadd.f32 %v94, %v395
    %v398 = vxor.u32 %v397, 2147483648
    %v399 = vmul.f32 %v398, 1.442695
    %v400 = vpow.pop %v399
    %v401 = vadd.f32 %v400, 1.0
    %v402 = vrcp.pop %v401
    %v403 = vmul.f32 %v401, %v402
    %v404 = vsub.f32 1.0, %v403
    %v405 = vmul.f32 %v402, %v404
    %v406 = vadd.f32 %v402, %v405
    %vm407 = vweird.f32 %v401
    %vm408 = vweird.f32 %v402
    %vm409 = vmor %vm407, %vm408
    %v410 = vsel %vm409, %v402, %v406
    %v411 = vand.u32 2147483647, %v401
    %vm412 = vcmp.eq.f32.partialorder %v411, 8.507059e+37
    %v413 = vand.u32 %v401, 2147483648
    %v414 = vor.u32 1.1754944e-38, %v413
    %v415 = vsel %vm412, %v414, %v410
    %v416 = vmul.f32 1.0, %v415
    %v417 = vtanh.pop %v397
    %v419 = vrot.slane %v364, 6
    %v421 = vmul.f32 %v416, %v419
    %423 = vrot.lane.b32.xlu0 %v417, 64
    %v424 = vpop.permute.xlu0 %423
    %v426 = vmul.f32 %v416, %v424
    %428 = vrot.lane.b32.xlu0 %v426, 32
    %v429 = vpop.permute.xlu0 %428
    %v431 = vadd.f32 %v421, %v429
    %v432 = vtanh.pop %v431
    %434 = vrot.lane.b32.xlu0 %v432, 64
    %v435 = vpop.permute.xlu0 %434
    %v437 = vmul.f32 %v416, %v435
    %439 = vrot.lane.b32.xlu0 %v437, 32
    %v440 = vpop.permute.xlu0 %439
    %v441 = vsel %vm100, %v440, 0
    %443 = vmatpush.msra.mxu0 0.0
    %444 = vmatpush.msra.mxu0 0.0
    %445 = vmatpush.msra.mxu0 0.0
    %446 = vmatpush.msra.mxu0 0.0
    %447 = vmatpush.msra.mxu0 0.0
    %448 = vmatpush.msra.mxu0 0.0
    %449 = vmatpush.msra.mxu0 0.0
    %450 = vmatpush.msra.mxu0 0.0
    %451 = vmatpush.msra.mxu0 0.0
    %452 = vmatpush.msra.mxu0 0.0
    %453 = vmatpush.msra.mxu0 0.0
    %454 = vmatpush.msra.mxu0 0.0
    %455 = vmatpush.msra.mxu0 %v99
    %456 = vmatpush.msra.mxu0 %v98
    %457 = vmatpush.msra.mxu0 %v97
    %458 = vmatpush.msra.mxu0 %v96
    %459 = vmatmul.f32.gmra.mxu0 %v441
    %v460 = vpop.f32.mrf.mxu0
    %v461 = vadd.f32 0.0, %v460
    %462 = vdwg.mxu0
    %v464 = vrot.slane %v461, 6
    %v466 = vadd.f32 %v94, %v464
    %v467 = vxor.u32 %v466, 2147483648
    %v468 = vmul.f32 %v467, 1.442695
    %v469 = vpow.pop %v468
    %v470 = vadd.f32 %v469, 1.0
    %v471 = vrcp.pop %v470
    %v472 = vmul.f32 %v470, %v471
    %v473 = vsub.f32 1.0, %v472
    %v474 = vmul.f32 %v471, %v473
    %v475 = vadd.f32 %v471, %v474
    %vm476 = vweird.f32 %v470
    %vm477 = vweird.f32 %v471
    %vm478 = vmor %vm476, %vm477
    %v479 = vsel %vm478, %v471, %v475
    %v480 = vand.u32 2147483647, %v470
    %vm481 = vcmp.eq.f32.partialorder %v480, 8.507059e+37
    %v482 = vand.u32 %v470, 2147483648
    %v483 = vor.u32 1.1754944e-38, %v482
    %v484 = vsel %vm481, %v483, %v479
    %v485 = vmul.f32 1.0, %v484
    %v486 = vtanh.pop %v466
    %v488 = vrot.slane %v431, 6
    %v490 = vmul.f32 %v485, %v488
    %492 = vrot.lane.b32.xlu0 %v486, 64
    %v493 = vpop.permute.xlu0 %492
    %v495 = vmul.f32 %v485, %v493
    %497 = vrot.lane.b32.xlu0 %v495, 32
    %v498 = vpop.permute.xlu0 %497
    %v500 = vadd.f32 %v490, %v498
    %v501 = vtanh.pop %v500
    %503 = vrot.lane.b32.xlu0 %v501, 64
    %v504 = vpop.permute.xlu0 %503
    %v506 = vmul.f32 %v485, %v504
    %v508 = vrot.slane %v506, 2
    %509 = vrot.lane.b32.xlu0 %v508, 32
    %v510 = vpop.permute.xlu0 %509
    %v511 = vsel %vm100, %v510, 0
    %513 = vmatpush.msra.mxu0 0.0
    %514 = vmatpush.msra.mxu0 0.0
    %515 = vmatpush.msra.mxu0 0.0
    %516 = vmatpush.msra.mxu0 0.0
    %517 = vmatpush.msra.mxu0 0.0
    %518 = vmatpush.msra.mxu0 0.0
    %519 = vmatpush.msra.mxu0 0.0
    %520 = vmatpush.msra.mxu0 0.0
    %521 = vmatpush.msra.mxu0 0.0
    %522 = vmatpush.msra.mxu0 0.0
    %523 = vmatpush.msra.mxu0 0.0
    %524 = vmatpush.msra.mxu0 0.0
    %525 = vmatpush.msra.mxu0 %v99
    %526 = vmatpush.msra.mxu0 %v98
    %527 = vmatpush.msra.mxu0 %v97
    %528 = vmatpush.msra.mxu0 %v96
    %529 = vmatmul.f32.gmra.mxu0 %v511
    %v530 = vpop.f32.mrf.mxu0
    %v531 = vadd.f32 0.0, %v530
    %532 = vdwg.mxu0
    %v534 = vrot.slane %v531, 4
    %v536 = vadd.f32 %v94, %v534
    %v537 = vxor.u32 %v536, 2147483648
    %v538 = vmul.f32 %v537, 1.442695
    %v539 = vpow.pop %v538
    %v540 = vadd.f32 %v539, 1.0
    %v541 = vrcp.pop %v540
    %v542 = vmul.f32 %v540, %v541
    %v543 = vsub.f32 1.0, %v542
    %v544 = vmul.f32 %v541, %v543
    %v545 = vadd.f32 %v541, %v544
    %vm546 = vweird.f32 %v540
    %vm547 = vweird.f32 %v541
    %vm548 = vmor %vm546, %vm547
    %v549 = vsel %vm548, %v541, %v545
    %v550 = vand.u32 2147483647, %v540
    %vm551 = vcmp.eq.f32.partialorder %v550, 8.507059e+37
    %v552 = vand.u32 %v540, 2147483648
    %v553 = vor.u32 1.1754944e-38, %v552
    %v554 = vsel %vm551, %v553, %v549
    %v555 = vmul.f32 1.0, %v554
    %v556 = vtanh.pop %v536
    %v558 = vrot.slane %v500, 6
    %v560 = vmul.f32 %v555, %v558
    %562 = vrot.lane.b32.xlu0 %v556, 64
    %v563 = vpop.permute.xlu0 %562
    %v565 = vmul.f32 %v555, %v563
    %567 = vrot.lane.b32.xlu0 %v565, 32
    %v568 = vpop.permute.xlu0 %567
    %v570 = vadd.f32 %v560, %v568
    %v571 = vtanh.pop %v570
    %573 = vrot.lane.b32.xlu0 %v571, 64
    %v574 = vpop.permute.xlu0 %573
    %v576 = vmul.f32 %v555, %v574
    %v578 = vrot.slane %v576, 4
    %579 = vrot.lane.b32.xlu0 %v578, 32
    %v580 = vpop.permute.xlu0 %579
    %v581 = vsel %vm100, %v580, 0
    %583 = vmatpush.msra.mxu0 0.0
    %584 = vmatpush.msra.mxu0 0.0
    %585 = vmatpush.msra.mxu0 0.0
    %586 = vmatpush.msra.mxu0 0.0
    %587 = vmatpush.msra.mxu0 0.0
    %588 = vmatpush.msra.mxu0 0.0
    %589 = vmatpush.msra.mxu0 0.0
    %590 = vmatpush.msra.mxu0 0.0
    %591 = vmatpush.msra.mxu0 0.0
    %592 = vmatpush.msra.mxu0 0.0
    %593 = vmatpush.msra.mxu0 0.0
    %594 = vmatpush.msra.mxu0 0.0
    %595 = vmatpush.msra.mxu0 %v99
    %596 = vmatpush.msra.mxu0 %v98
    %597 = vmatpush.msra.mxu0 %v97
    %598 = vmatpush.msra.mxu0 %v96
    %599 = vmatmul.f32.gmra.mxu0 %v581
    %v600 = vpop.f32.mrf.mxu0
    %v601 = vadd.f32 0.0, %v600
    %602 = vdwg.mxu0
    %v604 = vrot.slane %v601, 2
    %v606 = vadd.f32 %v94, %v604
    %v607 = vxor.u32 %v606, 2147483648
    %v608 = vmul.f32 %v607, 1.442695
    %v609 = vpow.pop %v608
    %v610 = vadd.f32 %v609, 1.0
    %v611 = vrcp.pop %v610
    %v612 = vmul.f32 %v610, %v611
    %v613 = vsub.f32 1.0, %v612
    %v614 = vmul.f32 %v611, %v613
    %v615 = vadd.f32 %v611, %v614
    %vm616 = vweird.f32 %v610
    %vm617 = vweird.f32 %v611
    %vm618 = vmor %vm616, %vm617
    %v619 = vsel %vm618, %v611, %v615
    %v620 = vand.u32 2147483647, %v610
    %vm621 = vcmp.eq.f32.partialorder %v620, 8.507059e+37
    %v622 = vand.u32 %v610, 2147483648
    %v623 = vor.u32 1.1754944e-38, %v622
    %v624 = vsel %vm621, %v623, %v619
    %v625 = vmul.f32 1.0, %v624
    %v626 = vtanh.pop %v606
    %v628 = vrot.slane %v570, 6
    %v630 = vmul.f32 %v625, %v628
    %632 = vrot.lane.b32.xlu0 %v626, 64
    %v633 = vpop.permute.xlu0 %632
    %v635 = vmul.f32 %v625, %v633
    %637 = vrot.lane.b32.xlu0 %v635, 32
    %v638 = vpop.permute.xlu0 %637
    %v640 = vadd.f32 %v630, %v638
    %v641 = vtanh.pop %v640
    %643 = vrot.lane.b32.xlu0 %v641, 64
    %v644 = vpop.permute.xlu0 %643
    %v646 = vmul.f32 %v625, %v644
    %v647 = vmax.f32 %v646, 0.0
    %v648 = vld [vmem:[%s4] sm:$0xff]
    %v649 = vld [vmem:[%s4 + $0x8] sm:$0xff]
    %v650 = vld [vmem:[%s4 + $0x10] sm:$0xff]
    %v651 = vld [vmem:[%s4 + $0x18] sm:$0xff]
    %v652 = vld [vmem:[%s5] sm:$0x1]
    %v654 = vperm.slane %v652, 0
    %v657 = vrot.slane %v647, 6
    %658 = vrot.lane.b32.xlu0 %v657, 32
    %v659 = vpop.permute.xlu0 %658
    %v660 = vsel %vm100, %v659, 0
    %662 = vmatpush.msra.mxu0 0.0
    %663 = vmatpush.msra.mxu0 0.0
    %664 = vmatpush.msra.mxu0 0.0
    %665 = vmatpush.msra.mxu0 0.0
    %666 = vmatpush.msra.mxu0 0.0
    %667 = vmatpush.msra.mxu0 0.0
    %668 = vmatpush.msra.mxu0 0.0
    %669 = vmatpush.msra.mxu0 0.0
    %670 = vmatpush.msra.mxu0 0.0
    %671 = vmatpush.msra.mxu0 0.0
    %672 = vmatpush.msra.mxu0 0.0
    %673 = vmatpush.msra.mxu0 0.0
    %674 = vmatpush.msra.mxu0 %v651
    %675 = vmatpush.msra.mxu0 %v650
    %676 = vmatpush.msra.mxu0 %v649
    %677 = vmatpush.msra.mxu0 %v648
    %678 = vmatmul.f32.gmra.mxu0 %v660
    %v679 = vpop.f32.mrf.mxu0
    %v680 = vadd.f32 %v654, %v679
    %681 = vdwg.mxu0
    %v682 = vmax.f32 %v680, 0.0
    %v683 = vld [vmem:[#allocation2] sm:$0xff]
    %v684 = vld [vmem:[#allocation2 + $0x8] sm:$0xff]
    %v685 = vld [vmem:[#allocation2 + $0x10] sm:$0xff]
    %v686 = vld [vmem:[#allocation2 + $0x18] sm:$0xff]
    %v687 = vld [vmem:[%s7] sm:$0x1]
    %v689 = vperm.slane %v687, 0
    %v692 = vsel %vm100, %v682, 0
    %694 = vmatpush.msra.mxu0 0.0
    %695 = vmatpush.msra.mxu0 0.0
    %696 = vmatpush.msra.mxu0 0.0
    %697 = vmatpush.msra.mxu0 0.0
    %698 = vmatpush.msra.mxu0 0.0
    %699 = vmatpush.msra.mxu0 0.0
    %700 = vmatpush.msra.mxu0 0.0
    %701 = vmatpush.msra.mxu0 0.0
    %702 = vmatpush.msra.mxu0 0.0
    %703 = vmatpush.msra.mxu0 0.0
    %704 = vmatpush.msra.mxu0 0.0
    %705 = vmatpush.msra.mxu0 0.0
    %706 = vmatpush.msra.mxu0 %v686
    %707 = vmatpush.msra.mxu0 %v685
    %708 = vmatpush.msra.mxu0 %v684
    %709 = vmatpush.msra.mxu0 %v683
    %710 = vmatmul.f32.gmra.mxu0 %v692
    %v711 = vpop.f32.mrf.mxu0
    %v712 = vadd.f32 %v689, %v711
    %713 = vdwg.mxu0
    %v714 = vmax.f32 %v712, 0.0
    %v715 = vld [vmem:[%s8] sm:$0xff]
    %v716 = vld [vmem:[%s8 + $0x8] sm:$0xff]
    %v717 = vld [vmem:[%s8 + $0x10] sm:$0xff]
    %v718 = vld [vmem:[%s8 + $0x18] sm:$0xff]
    %v719 = vld [vmem:[%s9] sm:$0x1]
    %v721 = vperm.slane %v719, 0
    %v724 = vsel %vm100, %v714, 0
    %726 = vmatpush.msra.mxu0 0.0
    %727 = vmatpush.msra.mxu0 0.0
    %728 = vmatpush.msra.mxu0 0.0
    %729 = vmatpush.msra.mxu0 0.0
    %730 = vmatpush.msra.mxu0 0.0
    %731 = vmatpush.msra.mxu0 0.0
    %732 = vmatpush.msra.mxu0 0.0
    %733 = vmatpush.msra.mxu0 0.0
    %734 = vmatpush.msra.mxu0 0.0
    %735 = vmatpush.msra.mxu0 0.0
    %736 = vmatpush.msra.mxu0 0.0
    %737 = vmatpush.msra.mxu0 0.0
    %738 = vmatpush.msra.mxu0 %v718
    %739 = vmatpush.msra.mxu0 %v717
    %740 = vmatpush.msra.mxu0 %v716
    %741 = vmatpush.msra.mxu0 %v715
    %742 = vmatmul.f32.gmra.mxu0 %v724
    %v743 = vpop.f32.mrf.mxu0
    %v744 = vadd.f32 %v721, %v743
    %745 = vdwg.mxu0
    %v746 = vmax.f32 %v744, 0.0
    %v747 = vld [vmem:[%s10] sm:$0xff]
    %v748 = vld [vmem:[%s10 + $0x8] sm:$0xff]
    %v749 = vld [vmem:[%s11] sm:$0x1]
    %v751 = vperm.slane %v749, 0
    %v754 = vsel %vm66, %v746, 0
    %756 = vmatpush.msra.mxu0 0.0
    %757 = vmatpush.msra.mxu0 0.0
    %758 = vmatpush.msra.mxu0 0.0
    %759 = vmatpush.msra.mxu0 0.0
    %760 = vmatpush.msra.mxu0 0.0
    %761 = vmatpush.msra.mxu0 0.0
    %762 = vmatpush.msra.mxu0 0.0
    %763 = vmatpush.msra.mxu0 0.0
    %764 = vmatpush.msra.mxu0 0.0
    %765 = vmatpush.msra.mxu0 0.0
    %766 = vmatpush.msra.mxu0 0.0
    %767 = vmatpush.msra.mxu0 0.0
    %768 = vmatpush.msra.mxu0 0.0
    %769 = vmatpush.msra.mxu0 0.0
    %770 = vmatpush.msra.mxu0 %v748
    %771 = vmatpush.msra.mxu0 %v747
    %772 = vmatmul.f32.gmra.mxu0 %v754
    %v773 = vpop.f32.mrf.mxu0
    %v774 = vadd.f32 %v751, %v773
    %775 = vdwg.mxu0
    %vm776 = vcmask 25600
    %777 = vst.msk [vmem:[#allocation5] sm:$0x3] %vm776, %v774
    // Predicated region
    $region54: #{emotion_classifier_forward.1} parent=1 // pred_check
      _
    $region55: #{emotion_classifier_forward.1} parent=1 // pred_check_branch
      %779 = sbr.rel (0) target = $region57
    $region56: #{emotion_classifier_forward.1} parent=1 // pred_region
      %781 = vsyncadd [#allocation4], 0
      %s783 = sshll.u32 [#allocation5], 4
      %s784 = int_to_ptr.vmem [resolvable:$true] %s783
      %s785 = sshll.u32 %s12, 4
      %s786 = int_to_ptr.hbm [resolvable:$true] %s785
      %788 = dma.vmem_to_hbm [thread:$0]  %s784, 32, %s786, [#allocation4]
    $region57: #{emotion_classifier_forward.1} parent=1 // pred_fallthru
      _
    // Predicated region
    $region58: #{emotion_classifier_forward.1} parent=1 // pred_check
      _
    $region59: #{emotion_classifier_forward.1} parent=1 // pred_check_branch
      %790 = sbr.rel (0) target = $region61
    $region60: #{emotion_classifier_forward.1} parent=1 // pred_region
      %792 = dma.done [#allocation4], 32
    $region61: #{emotion_classifier_forward.1} parent=1 // pred_fallthru
      _
    %793 = vsyncpa [#allocation3], 1
    %794 = vsyncpa [#allocation4], 1

</llo_original>
